<compile_context>
chip_gen: v6e
topology: v6e:2x2x1
jax: 0.10.0
libtpu: 0.0.40
codegen_flags: <defaults>
</compile_context>

<pallas_src>
import jax
import jax.numpy as jnp
from jax.experimental import pallas as pl
from jax.experimental.pallas import tpu as pltpu


def _linear_vpu_kernel(params_ref, x_ref, o_ref):
    # params_ref: (3,) f32 in SMEM = [w0, w1, b]
    # x_ref:      (2, T) f32 in VMEM (batch on the lane axis)
    # o_ref:      (1, T) f32 in VMEM (lane-dense output)
    w0 = params_ref[0]
    w1 = params_ref[1]
    b = params_ref[2]
    xv = x_ref[...]                       # single load of the tile into vregs
    o_ref[...] = xv[0:1, :] * w0 + xv[1:2, :] * w1 + b


def _pick_lane_tile(n, *, max_tile=256 * 1024, min_tile=1024, target_steps=8):
    """Biggest tile that fits scoped VMEM on every generation while keeping
    >= ~target_steps grid steps (pipeline depth + v7x megacore sharding)."""
    t = max(min_tile, -(-n // target_steps))      # ceil(n / target_steps)
    t = min(t, max_tile)
    t = ((t + 127) // 128) * 128                  # lane-dense multiple of 128
    return t


def netb_forward_lane_major(x_t, weight, bias, *, max_lane_tile=256 * 1024):
    """Optimized path: x_t (2, N) lane-major -> (1, N). No boundary relayouts."""
    two, n = x_t.shape
    assert two == 2 and weight.shape == (1, 2) and bias.shape == (1,)
    params = jnp.concatenate(
        [weight.reshape(-1), bias]).astype(jnp.float32)          # (3,) = [w0, w1, b]
    x_t = x_t.astype(jnp.float32)

    if n <= 1024:
        # Genuinely small: one whole-array invocation, no grid / pipeline machinery.
        return pl.pallas_call(
            _linear_vpu_kernel,
            out_shape=jax.ShapeDtypeStruct((1, n), jnp.float32),
            in_specs=[
                pl.BlockSpec(memory_space=pltpu.MemorySpace.SMEM),
                pl.BlockSpec(memory_space=pltpu.MemorySpace.VMEM),
            ],
            out_specs=pl.BlockSpec(memory_space=pltpu.MemorySpace.VMEM),
        )(params, x_t)

    t = _pick_lane_tile(n, max_tile=max_lane_tile)
    grid = pl.cdiv(n, t)                           # ragged last block is masked
    return pl.pallas_call(
        _linear_vpu_kernel,
        out_shape=jax.ShapeDtypeStruct((1, n), jnp.float32),
        grid_spec=pltpu.PrefetchScalarGridSpec(
            num_scalar_prefetch=1,                 # params -> SMEM
            grid=(grid,),
            in_specs=[pl.BlockSpec((2, t), lambda i, p: (0, i))],
            out_specs=pl.BlockSpec((1, t), lambda i, p: (0, i)),
        ),
        compiler_params=pltpu.CompilerParams(
            dimension_semantics=("parallel",)),    # shards across v7x's 2 TCs
    )(params, x_t)


def netb_forward(x, weight, bias, *, pallas_min_batch=4096):
    """PyTorch-compatible NetB forward: x (N, 2) -> (N, 1)."""
    n, in_f = x.shape
    assert in_f == 2 and weight.shape == (1, 2) and bias.shape == (1,)
    if n < pallas_min_batch:
        # Tiny batch: the fixed pallas_call launch/DMA setup dominates a
        # 6-flop-per-row op; a fused XLA elementwise is strictly cheaper.
        return (x @ weight.T.astype(x.dtype) + bias.astype(x.dtype)).astype(x.dtype)
    # NOTE: the transpose / reshape below are pure layout traffic at the
    # PyTorch-compat boundary; callers able to supply (2, N) and consume
    # (1, N) should call netb_forward_lane_major directly and skip them.
    out_1n = netb_forward_lane_major(x.T, weight, bias)
    return out_1n.reshape(n, 1).astype(x.dtype)


if __name__ == "__main__":
    key = jax.random.PRNGKey(0)
    kx, kw, kb, kx2, kx3 = jax.random.split(key, 5)

    # NetB.__init__: nn.Linear(2, 1) -> weight (1, 2), bias (1,)
    weight = jax.random.normal(kw, (1, 2), dtype=jnp.float32) * 0.5
    bias = jax.random.normal(kb, (1,), dtype=jnp.float32) * 0.1

    # 1) Spec-consistent small batch through the PyTorch-compat wrapper
    #    (bypasses Pallas: fused XLA elementwise).
    x = jax.random.normal(kx, (8, 2), dtype=jnp.float32)
    out = jax.block_until_ready(netb_forward(x, weight, bias))
    ref = x @ weight.T + bias
    assert out.shape == (8, 1)
    assert jnp.allclose(out, ref, atol=1e-5, rtol=1e-5)

    # 2) Lane-major Pallas path (no boundary relayouts), multi-step parallel grid.
    n1 = 4096
    x_t1 = jax.random.normal(kx2, (2, n1), dtype=jnp.float32)
    out1 = jax.block_until_ready(netb_forward_lane_major(x_t1, weight, bias))
    ref1 = weight @ x_t1 + bias.reshape(1, 1)
    assert out1.shape == (1, n1)
    assert jnp.allclose(out1, ref1, atol=1e-5, rtol=1e-5)

    # 3) PyTorch-compat wrapper on a large, ragged batch (exercises the
    #    cdiv grid with a masked last block).
    n2 = 8200
    x2 = jax.random.normal(kx3, (n2, 2), dtype=jnp.float32)
    out2 = jax.block_until_ready(netb_forward(x2, weight, bias))
    ref2 = x2 @ weight.T + bias
    assert out2.shape == (n2, 1)
    assert jnp.allclose(out2, ref2, atol=1e-4, rtol=1e-5)

    print("KERNEL_OK")
</pallas_src>

<mosaic_0001>
module attributes {stable_mosaic.version = 11 : i64} {
  func.func @_linear_vpu_kernel(%arg0: i32, %arg1: memref<3xf32, #tpu.memory_space<smem>>, %arg2: memref<2x1024xf32, #tpu.memory_space<vmem>>, %arg3: memref<1x1024xf32, #tpu.memory_space<vmem>>) attributes {dimension_semantics = [#tpu.dimension_semantics<parallel>], iteration_bounds = array<i64: 4>, scalar_prefetch = 1 : i64, scratch_operands = 0 : i64, tpu.core_type = #tpu.core_type<tc>, window_params = [{transform_indices = @transform_0, window_bounds = array<i64: 2, 1024>}, {transform_indices = @transform_1, window_bounds = array<i64: 1, 1024>}]} {
    %c0 = arith.constant 0 : index
    %0 = memref.load %arg1[%c0] : memref<3xf32, #tpu.memory_space<smem>>
    %c1 = arith.constant 1 : index
    %1 = memref.load %arg1[%c1] : memref<3xf32, #tpu.memory_space<smem>>
    %c2 = arith.constant 2 : index
    %2 = memref.load %arg1[%c2] : memref<3xf32, #tpu.memory_space<smem>>
    %c0_0 = arith.constant 0 : index
    %c0_1 = arith.constant 0 : index
    %3 = vector.load %arg2[%c0_0, %c0_1] : memref<2x1024xf32, #tpu.memory_space<vmem>>, vector<2x1024xf32>
    %4 = vector.extract_strided_slice %3 {offsets = [0, 0], sizes = [1, 1024], strides = [1, 1]} : vector<2x1024xf32> to vector<1x1024xf32>
    %5 = vector.broadcast %0 : f32 to vector<1x1024xf32>
    %6 = arith.mulf %4, %5 : vector<1x1024xf32>
    %7 = vector.extract_strided_slice %3 {offsets = [1, 0], sizes = [1, 1024], strides = [1, 1]} : vector<2x1024xf32> to vector<1x1024xf32>
    %8 = vector.broadcast %1 : f32 to vector<1x1024xf32>
    %9 = arith.mulf %7, %8 : vector<1x1024xf32>
    %10 = arith.addf %6, %9 : vector<1x1024xf32>
    %11 = vector.broadcast %2 : f32 to vector<1x1024xf32>
    %12 = arith.addf %10, %11 : vector<1x1024xf32>
    %c0_2 = arith.constant 0 : index
    %c0_3 = arith.constant 0 : index
    %13 = vector.load %arg3[%c0_2, %c0_3] : memref<1x1024xf32, #tpu.memory_space<vmem>>, vector<1x1024xf32>
    tpu.vector_store %arg3[%c0_2, %c0_3], %12 {strides = array<i32>} : memref<1x1024xf32, #tpu.memory_space<vmem>>, vector<1x1024xf32>,
    return
  }
  func.func @transform_0(%arg0: i32, %arg1: memref<3xf32, #tpu.memory_space<smem>>) -> (i32, i32) {
    %c0_i32 = arith.constant 0 : i32
    %c0_i32_0 = arith.constant 0 : i32
    return %c0_i32, %arg0 : i32, i32
  }
  func.func @transform_1(%arg0: i32, %arg1: memref<3xf32, #tpu.memory_space<smem>>) -> (i32, i32) {
    %c0_i32 = arith.constant 0 : i32
    %c0_i32_0 = arith.constant 0 : i32
    return %c0_i32, %arg0 : i32, i32
  }
}

</mosaic_0001>

<llo_original>
// kernel: tpu_custom_call.1
$region0: #{tpu_custom_call.1}
  #allocation0 [shape = 'u32[]', space=smem, size = 0x4, offset = 0x4, fixed_abs, tag = 'smem constant byte address 0x4 - core index']
  #allocation1 [shape = 'u32[144,128]{1,0:T(1,128)}', space=vmem, size = 0x12000, scoped, tag = 'internal scratch']
  #allocation2 [shape = 's32[1]{0}', space=sflag, size = 0x4, scoped, tag = 'scoped memory for tpu_custom_call.1']
  #allocation3 [shape = 'u8[512]{0}', space=smem, size = 0x200, scoped, tag = 'prefetched SMEM operand 0']
  %s0 = inlined_call_operand.hbm [shape: f32[3], index: 0, kind: input, shape index: {}]
  %s1 = inlined_call_operand.hbm [shape: f32[2,4096], index: 1, kind: input, shape index: {}]
  %s2 = inlined_call_operand.hbm [shape: f32[1,4096], index: 2, kind: output, shape index: {}]
  %s3 = sld [smem:[#allocation0]]
  $region41: #{tpu_custom_call.1} parent=0
    _
  %s5 = ssub.s32 1, %s3
  %s6 = scalar_select 0, %s5, %s3
  %8 = dma.hbm_to_smem %s0, 16, [#allocation3], [#allocation2]
  %9 = dma.done [#allocation2], 16
  %10 = sfence
  $region1: #{tpu_custom_call.1} parent=0
    #allocation4 [shape = 'u8[16384]{0}', space=vmem, size = 0x4000, scoped, tag = 'input window, operand 1']
    #allocation5 [shape = 's32[2]{0}', space=sflag, size = 0x8, scoped, tag = 'scoped memory for tpu_custom_call.1']
    #allocation6 [shape = 's32[2]{0}', space=sflag, size = 0x8, scoped, tag = 'scoped memory for tpu_custom_call.1']
    #allocation7 [shape = 'u8[8192]{0}', space=vmem, size = 0x2000, scoped, tag = 'output window, operand 0']
    %11 = vsyncpa [#allocation5], 0
    %s12 = scalar_lea.sflag [#allocation5], 1
    %13 = vsyncpa %s12, 0
    %14 = vsyncpa [#allocation6], 0
    %s15 = scalar_lea.sflag [#allocation6], 1
    %16 = vsyncpa %s15, 0
    loop: start=0, step=1, limit=6
    $region2: #{tpu_custom_call.1} parent=1 // loop_pre_header
      _
    $region3: #{tpu_custom_call.1} parent=1 // loop_header
      %s18 = sphi 0, %s22
      %p19 = scmp.ge.s32.totalorder %s18, 6
      %s28 = sphi 0, %s30
      %s31 = sphi 0, %s28
      %s32 = sphi 0, %s31
      %s48 = sphi 0, %s32
      %s54 = sphi 0, %s56
      %s57 = sphi 0, %s54
      %s58 = sphi 0, %s57
      %s74 = sphi 0, %s58
    $region4: #{tpu_custom_call.1} parent=1 // loop_header_branch
      %21 = sbr.rel (%p19) target = $region8
    $region5: #{tpu_custom_call.1} parent=1 // loop_body
      %s23 = ssub.s32 %s18, 1
      %s24 = ssub.s32 %s18, 2
      %s25 = sadd.s32 %s18, 1
      %s26 = ssub.s32 %s18, %s25
      %p27 = scmp.eq.s32.totalorder %s26, 0
      %s29 = sadd.s32 %s28, 1
      %s30 = scalar_select %p27, %s28, %s29
      %p33 = pneg %p27
      %p34 = scmp.eq.s32.totalorder %s18, 3
      %p35 = por %p33, %p34
      %p36 = scmp.ne.s32.totalorder %s28, %s31
      %p37 = scmp.eq.s32.totalorder %s18, 0
      %p38 = por %p36, %p37
      %p39 = scmp.ne.s32.totalorder %s28, %s31
      %p40 = scmp.eq.s32.totalorder %s23, 3
      %p41 = por %p39, %p40
      %p42 = scmp.ne.s32.totalorder %s31, %s32
      %p43 = scmp.eq.s32.totalorder %s23, 0
      %p44 = por %p42, %p43
      %p45 = scmp.ne.s32.totalorder %s31, %s32
      %p46 = scmp.eq.s32.totalorder %s24, 3
      %p47 = por %p45, %p46
      %p49 = scmp.ne.s32.totalorder %s32, %s48
      %p50 = scmp.eq.s32.totalorder %s24, 0
      %p51 = por %p49, %p50
      %s52 = ssub.s32 %s18, %s25
      %p53 = scmp.eq.s32.totalorder %s52, 0
      %s55 = sadd.s32 %s54, 1
      %s56 = scalar_select %p53, %s54, %s55
      %p59 = pneg %p53
      %p60 = scmp.eq.s32.totalorder %s18, 3
      %p61 = por %p59, %p60
      %p62 = scmp.ne.s32.totalorder %s54, %s57
      %p63 = scmp.eq.s32.totalorder %s18, 0
      %p64 = por %p62, %p63
      %p65 = scmp.ne.s32.totalorder %s54, %s57
      %p66 = scmp.eq.s32.totalorder %s23, 3
      %p67 = por %p65, %p66
      %p68 = scmp.ne.s32.totalorder %s57, %s58
      %p69 = scmp.eq.s32.totalorder %s23, 0
      %p70 = por %p68, %p69
      %p71 = scmp.ne.s32.totalorder %s57, %s58
      %p72 = scmp.eq.s32.totalorder %s24, 3
      %p73 = por %p71, %p72
      %p75 = scmp.ne.s32.totalorder %s58, %s74
      %p76 = scmp.eq.s32.totalorder %s24, 0
      %p77 = por %p75, %p76
      %p78 = scmp.le.s32.totalorder 1, %s18
      %p79 = scmp.lt.s32.totalorder %s18, 5
      %p80 = pnand %p78, %p79
      %p81 = pneg %p80
      // Predicated region
      $region9: #{tpu_custom_call.1} parent=5 // pred_check
        _
      $region10: #{tpu_custom_call.1} parent=5 // pred_check_branch
        %83 = sbr.rel (%p80) target = $region12
      $region11: #{tpu_custom_call.1} parent=5 // pred_region
        %s84 = ssub.s32 %s18, 1
      $region12: #{tpu_custom_call.1} parent=5 // pred_fallthru
        _
      %p85 = scmp.lt.s32.totalorder %s18, 4
      // Predicated region
      $region13: #{tpu_custom_call.1} parent=5 // pred_check
        %p86 = pneg %p85
      $region14: #{tpu_custom_call.1} parent=5 // pred_check_branch
        %88 = sbr.rel (%p86) target = $region16
      $region15: #{tpu_custom_call.1} parent=5 // pred_region
        // Predicated region
        $region17: #{tpu_custom_call.1} parent=15 // pred_check
          %p89 = pneg %p38
        $region18: #{tpu_custom_call.1} parent=15 // pred_check_branch
          %91 = sbr.rel (%p89) target = $region20
        $region19: #{tpu_custom_call.1} parent=15 // pred_region
          %s92 = sand.u32 %s28, 1
          %s93 = scalar_lea.sflag [#allocation5], %s92
          %s94 = sand.u32 %s28, 1
          %s95 = smul.addr %s94, 16
          %s96 = scalar_lea.vmem [#allocation4], %s95
          %s97 = smul.u32 8, %s18
          %s99 = ssub.s32 256, 256
          %100 = vsyncadd %s93, %s99
          %s101 = smul.addr %s97, 32
          %s102 = scalar_lea.hbm %s1, %s101
          %s104 = sshll.u32 %s96, 4
          %s105 = int_to_ptr.vmem [resolvable:$true] %s104
          %107 = dma.hbm_to_vmem [thread:$0]  %s102, 256, %s105, %s93
        $region20: #{tpu_custom_call.1} parent=15 // pred_fallthru
          _
      $region16: #{tpu_custom_call.1} parent=5 // pred_fallthru
        _
      %p108 = scmp.le.s32.totalorder 1, %s18
      %p109 = scmp.lt.s32.totalorder %s18, 5
      %p110 = pnand %p108, %p109
      %p111 = pneg %p110
      // Predicated region
      $region21: #{tpu_custom_call.1} parent=5 // pred_check
        _
      $region22: #{tpu_custom_call.1} parent=5 // pred_check_branch
        %113 = sbr.rel (%p110) target = $region24
      $region23: #{tpu_custom_call.1} parent=5 // pred_region
        %s114 = ssub.s32 %s18, 1
        %s115 = sand.u32 %s31, 1
        %s116 = scalar_lea.sflag [#allocation5], %s115
        %s117 = sand.u32 %s31, 1
        %s118 = smul.addr %s117, 16
        %s119 = scalar_lea.vmem [#allocation4], %s118
        // Predicated region
        $region25: #{tpu_custom_call.1} parent=23 // pred_check
          %p120 = pneg %p44
        $region26: #{tpu_custom_call.1} parent=23 // pred_check_branch
          %122 = sbr.rel (%p120) target = $region28
        $region27: #{tpu_custom_call.1} parent=23 // pred_region
          %123 = dma.done %s116, 256
        $region28: #{tpu_custom_call.1} parent=23 // pred_fallthru
          _
        %s124 = sand.u32 %s31, 1
        %s125 = scalar_lea.sflag [#allocation5], %s124
        %s126 = sand.u32 %s31, 1
        %s127 = smul.addr %s126, 16
        %s128 = scalar_lea.vmem [#allocation4], %s127
        %p129 = pneg %p44
        %p130 = pneg %p41
        %p131 = pneg %p70
        %p132 = pneg %p67
        %s133 = sand.u32 %s57, 1
        %s134 = scalar_lea.sflag [#allocation6], %s133
        %s135 = sand.u32 %s57, 1
        %s136 = smul.addr %s135, 8
        %s137 = scalar_lea.vmem [#allocation7], %s136
        %s138 = smul.u32 8, %s23
        %s139 = smul.u32 8, %s23
        %s140 = sld [smem:[#allocation3]]
        %s141 = sld [smem:[#allocation3 + $0x1]]
        %s142 = sld [smem:[#allocation3 + $0x2]]
        %v143 = vld [vmem:[%s119] sm:$0xff]
        %v144 = vld [vmem:[%s119 + $0x8] sm:$0xff]
        %v145 = vstv %s140
        %v146 = vmul.f32 %v143, %v145
        %v147 = vmul.f32 %v144, %v145
        %v148 = vstv %s141
        %v149 = vmul.f32 %v143, %v148
        %v150 = vmul.f32 %v144, %v148
        %v153 = vrot.slane %v149, 7
        %v154 = vrot.slane %v153, 2
        %v155 = vrot.slane %v150, 7
        %v156 = vrot.slane %v155, 2
        %v159 = vadd.f32 %v146, %v154
        %v160 = vadd.f32 %v147, %v156
        %v161 = vstv %s142
        %v162 = vadd.f32 %v159, %v161
        %v163 = vadd.f32 %v160, %v161
        %v167 = vunpack.c.l.s4 1966171168
        %v168 = vunpack.c.0.s8 %v167
        %v169 = vlaneseq
        %v170 = vshrl.u32 %v169, 7
        %v171 = vsub.s32 %v168, %v170
        %v172 = vrot.slane %v162, %v171
        %v174 = vunpack.c.l.s4 1966171168
        %v175 = vunpack.c.0.s8 %v174
        %v176 = vlaneseq
        %v177 = vshrl.u32 %v176, 7
        %v178 = vsub.s32 %v175, %v177
        %v179 = vrot.slane %v163, %v178
        %v180 = vcombine.low %v172, %v179
        %182 = vst [vmem:[%s137] sm:$0xff] %v180
        %s183 = sand.u32 %s57, 1
        %s184 = scalar_lea.sflag [#allocation6], %s183
        %s185 = sand.u32 %s57, 1
        %s186 = smul.addr %s185, 8
        %s187 = scalar_lea.vmem [#allocation7], %s186
        // Predicated region
        $region29: #{tpu_custom_call.1} parent=23 // pred_check
          %p188 = pneg %p67
        $region30: #{tpu_custom_call.1} parent=23 // pred_check_branch
          %190 = sbr.rel (%p188) target = $region32
        $region31: #{tpu_custom_call.1} parent=23 // pred_region
          %s191 = smul.u32 8, %s23
          %s193 = ssub.s32 128, 128
          %194 = vsyncadd %s184, %s193
          %s195 = smul.addr %s191, 16
          %s196 = scalar_lea.hbm %s2, %s195
          %s198 = sshll.u32 %s187, 4
          %s199 = int_to_ptr.vmem [resolvable:$true] %s198
          %201 = dma.vmem_to_hbm [thread:$0]  %s199, 128, %s196, %s184
        $region32: #{tpu_custom_call.1} parent=23 // pred_fallthru
          _
      $region24: #{tpu_custom_call.1} parent=5 // pred_fallthru
        _
      %p202 = scmp.le.s32.totalorder 2, %s18
      // Predicated region
      $region33: #{tpu_custom_call.1} parent=5 // pred_check
        %p203 = pneg %p202
      $region34: #{tpu_custom_call.1} parent=5 // pred_check_branch
        %205 = sbr.rel (%p203) target = $region36
      $region35: #{tpu_custom_call.1} parent=5 // pred_region
        %s206 = ssub.s32 %s18, 2
        // Predicated region
        $region37: #{tpu_custom_call.1} parent=35 // pred_check
          %p207 = pneg %p73
        $region38: #{tpu_custom_call.1} parent=35 // pred_check_branch
          %209 = sbr.rel (%p207) target = $region40
        $region39: #{tpu_custom_call.1} parent=35 // pred_region
          %s210 = sand.u32 %s58, 1
          %s211 = scalar_lea.sflag [#allocation6], %s210
          %s212 = sand.u32 %s58, 1
          %s213 = smul.addr %s212, 8
          %s214 = scalar_lea.vmem [#allocation7], %s213
          %215 = dma.done %s211, 128
        $region40: #{tpu_custom_call.1} parent=35 // pred_fallthru
          _
      $region36: #{tpu_custom_call.1} parent=5 // pred_fallthru
        _
    $region6: #{tpu_custom_call.1} parent=1 // loop_footer
      %s22 = sadd.s32 1, %s18
    $region7: #{tpu_custom_call.1} parent=1 // loop_footer_branch
      %17 = sbr.rel target = $region3
    $region8: #{tpu_custom_call.1} parent=1 // loop_exit
      _
    %216 = vsyncpa [#allocation5], 1
    %s217 = scalar_lea.sflag [#allocation5], 1
    %218 = vsyncpa %s217, 1
    %219 = vsyncpa [#allocation6], 1
    %s220 = scalar_lea.sflag [#allocation6], 1
    %221 = vsyncpa %s220, 1

</llo_original>
